<compile_context>
chip_gen: v5e
topology: v5e:2x2
jax: 0.10.0
libtpu: 0.0.40
codegen_flags: <defaults>
</compile_context>

<pallas_src>
import math
from functools import partial

import jax
import jax.numpy as jnp
from jax.experimental import pallas as pl
from jax.experimental.pallas import tpu as pltpu


def init_kernel_jax(frame_len, frame_hop, num_fft=None):
    """Replicates init_kernel() from the PyTorch module (sqrt_hann window)."""
    if not num_fft:
        fft_size = 2 ** math.ceil(math.log2(frame_len))
    else:
        fft_size = num_fft
    # torch.hann_window(frame_len) is periodic: 0.5*(1 - cos(2*pi*n/frame_len))
    n = jnp.arange(frame_len, dtype=jnp.float32)
    window = jnp.sqrt(0.5 * (1.0 - jnp.cos(2.0 * jnp.pi * n / frame_len)))
    S_ = 0.5 * (fft_size * fft_size / frame_hop) ** 0.5
    F_bins = fft_size // 2 + 1
    j = jnp.arange(frame_len, dtype=jnp.float32)[:, None]   # time index within frame
    f = jnp.arange(F_bins, dtype=jnp.float32)[None, :]      # frequency bin
    ang = 2.0 * jnp.pi * j * f / fft_size
    real = jnp.cos(ang) / S_                                 # (frame_len, F_bins)
    imag = -jnp.sin(ang) / S_
    k_real = real.T * window[None, :]                        # (F_bins, frame_len)
    k_imag = imag.T * window[None, :]                        # (F_bins, frame_len)
    K = jnp.concatenate([k_real, k_imag], axis=0)            # (fft_size+2, frame_len)
    return K.astype(jnp.float32), fft_size


def _round_up(x, m):
    return (x + m - 1) // m * m


def _choose_col_block(stride):
    """Output column block: multiple of both the hop (identical per-block pattern)
    and 128 (lane-dense, unmasked vst).  Smallest such value keeps the zero
    redundancy of the scattered tile minimal."""
    return math.lcm(int(stride), 128)


def build_kscat_tile(K, W, B, stride, pad_front, rows_pad):
    """Block-sparse overlap-add kernel tile, identical for every output column block.

    tile[w*CF + f, b] = K[f, b - (w - pad_front)*stride]  if the index is in [0, L), else 0.
    Shape (rows_pad, B), bf16.  O(W*CF*B) — independent of T.
    """
    CF, L = K.shape
    b = jnp.arange(B)[None, :]                     # (1, B)
    w = jnp.arange(W)[:, None]                     # (W, 1)
    l = b - (w - pad_front) * stride               # (W, B) tap index into the frame
    valid = (l >= 0) & (l < L)
    tile = jnp.where(valid[None, :, :], K[:, jnp.clip(l, 0, L - 1)], 0.0)  # (CF, W, B)
    tile = jnp.transpose(tile, (1, 0, 2)).reshape(W * CF, B)               # row = w*CF + f
    if rows_pad > W * CF:                           # pad contraction dim to a 128 multiple
        tile = jnp.pad(tile, ((0, rows_pad - W * CF), (0, 0)))
    return tile.astype(jnp.bfloat16)


def _istft_block_matmul_kernel(x_ref, k_ref, o_ref):
    # x_ref: (TM, Kc)  bf16 — flattened (frame-window x channel) rows, one output block each
    # k_ref: (Kc, B)   bf16 — scattered kernel tile, resident (constant index_map)
    # o_ref: (TM, B)   f32  — lane-dense output block (single unmasked store)
    o_ref[...] = jnp.dot(x_ref[...], k_ref[...],
                         preferred_element_type=jnp.float32)


@partial(jax.jit, static_argnames=("stride", "squeeze"))
def istft_ri_pallas(r, i, K, stride, squeeze=False):
    """Pallas equivalent of iSTFT_ri.forward(r, i, squeeze)."""
    N, F_bins, T = r.shape
    CF, L = K.shape
    assert CF == 2 * F_bins
    out_len = (T - 1) * stride + L

    # ---- block geometry (all Python ints, shape-static) -------------------------------
    B = _choose_col_block(stride)                  # output columns per block
    Bs = B // stride                               # frames whose start lies in one block
    pad_front = pl.cdiv(L, stride) - 1             # halo frames reaching into a block
    W = Bs + pad_front                             # frames overlapping one block
    n_blocks = pl.cdiv(out_len, B)
    T_pad = (n_blocks - 1) * Bs + W                # padded frame count covering all blocks
    pad_back = T_pad - pad_front - T

    Kc = W * CF                                    # contraction size per block
    Kc_pad = _round_up(Kc, 128)                    # regular MXU passes (zero rows are free)

    M = N * n_blocks                               # MXU M axis = batch * column blocks
    TM = min(128, _round_up(M, 8))
    M_pad = _round_up(M, TM)
    if M_pad // TM < 2 and M_pad >= 16 and M_pad % 16 == 0:
        TM = M_pad // 2                            # >=2 parallel grid steps -> both v7x TCs

    # ---- wrapper-side layout: t-major, zero-padded, unfolded into per-block windows ---
    x = jnp.concatenate([r, i], axis=1).astype(jnp.bfloat16)   # (N, CF, T), bf16 early
    x = jnp.transpose(x, (0, 2, 1))                             # (N, T, CF)  t-major
    x = jnp.pad(x, ((0, 0), (pad_front, pad_back), (0, 0)))     # (N, T_pad, CF)
    win_idx = jnp.arange(n_blocks)[:, None] * Bs + jnp.arange(W)[None, :]   # (n_blocks, W)
    x_win = x[:, win_idx, :]                                    # (N, n_blocks, W, CF)
    x_win = x_win.reshape(M, Kc)
    x_win = jnp.pad(x_win, ((0, M_pad - M), (0, Kc_pad - Kc)))  # (M_pad, Kc_pad) bf16

    kscat = build_kscat_tile(K, W, B, stride, pad_front, Kc_pad)  # (Kc_pad, B) bf16

    out = pl.pallas_call(
        _istft_block_matmul_kernel,
        out_shape=jax.ShapeDtypeStruct((M_pad, B), jnp.float32),
        grid_spec=pltpu.PrefetchScalarGridSpec(
            num_scalar_prefetch=0,
            grid=(M_pad // TM,),
            in_specs=[
                pl.BlockSpec((TM, Kc_pad), lambda m: (m, 0)),
                # Constant index_map -> the Kscat tile is DMA'd once and stays in VMEM.
                pl.BlockSpec((Kc_pad, B), lambda m: (0, 0)),
            ],
            out_specs=pl.BlockSpec((TM, B), lambda m: (m, 0)),
        ),
        compiler_params=pltpu.CompilerParams(
            dimension_semantics=("parallel",),
            vmem_limit_bytes=32 * 1024 * 1024,
        ),
    )(x_win, kscat)

    # Row m = n*n_blocks + j holds output columns [j*B, (j+1)*B) of batch n, so this
    # reshape is a contiguous view of the padded signal.  The final slice to out_len is
    # kept only to match the PyTorch output shape exactly; callers that can consume the
    # padded slab should drop it to avoid the extra HBM copy.
    s = out[:M].reshape(N, n_blocks * B)[:, :out_len]
    s = s[:, None, :]                              # (N, 1, out_len)
    if squeeze:
        s = jnp.squeeze(s)
    return s


if __name__ == "__main__":
    frame_len = 64
    frame_hop = 16
    K, fft_size = init_kernel_jax(frame_len, frame_hop)    # (fft_size+2, frame_len)
    F_bins = fft_size // 2 + 1                              # 33

    N, T = 2, 8
    key = jax.random.PRNGKey(0)
    kr_key, ki_key = jax.random.split(key)
    r = jax.random.normal(kr_key, (N, F_bins, T), dtype=jnp.float32)
    i = jax.random.normal(ki_key, (N, F_bins, T), dtype=jnp.float32)

    s = istft_ri_pallas(r, i, K, stride=frame_hop)
    s = jax.block_until_ready(s)

    # Pure-JAX f32 reference (same math as F.conv_transpose1d with a (CF, 1, L) kernel).
    c = jnp.concatenate([r, i], axis=1)                     # (N, CF, T)
    frames = jnp.einsum("nct,cl->ntl", c, K)                # (N, T, L)
    out_len = (T - 1) * frame_hop + frame_len
    s_ref = jnp.zeros((N, out_len), dtype=jnp.float32)
    for t in range(T):
        s_ref = s_ref.at[:, t * frame_hop: t * frame_hop + frame_len].add(
            frames[:, t, :])
    s_ref = s_ref[:, None, :]

    assert s.shape == (N, 1, out_len), s.shape
    # bf16 operands + f32 accumulation -> loose tolerance vs the pure-f32 reference.
    assert jnp.allclose(s, s_ref, atol=5e-2, rtol=5e-2), float(
        jnp.max(jnp.abs(s - s_ref)))
    print("KERNEL_OK")
</pallas_src>

<mosaic_0001>
module attributes {stable_mosaic.version = 11 : i64} {
  func.func @_istft_block_matmul_kernel(%arg0: i32, %arg1: memref<8x768xbf16, #tpu.memory_space<vmem>>, %arg2: memref<768x128xbf16, #tpu.memory_space<vmem>>, %arg3: memref<8x128xf32, #tpu.memory_space<vmem>>) attributes {dimension_semantics = [#tpu.dimension_semantics<parallel>], iteration_bounds = array<i64: 1>, scalar_prefetch = 0 : i64, scratch_operands = 0 : i64, tpu.core_type = #tpu.core_type<tc>, window_params = [{transform_indices = @transform_0, window_bounds = array<i64: 8, 768>}, {pipeline_mode = #tpu.pipeline_mode<synchronous>, transform_indices = @transform_1, window_bounds = array<i64: 768, 128>}, {transform_indices = @transform_2, window_bounds = array<i64: 8, 128>}]} {
    %c0 = arith.constant 0 : index
    %c0_0 = arith.constant 0 : index
    %0 = vector.load %arg1[%c0, %c0_0] : memref<8x768xbf16, #tpu.memory_space<vmem>>, vector<8x768xbf16>
    %c0_1 = arith.constant 0 : index
    %c0_2 = arith.constant 0 : index
    %1 = vector.load %arg2[%c0_1, %c0_2] : memref<768x128xbf16, #tpu.memory_space<vmem>>, vector<768x128xbf16>
    %cst = arith.constant dense<0.000000e+00> : vector<8x128xf32>
    %2 = tpu.matmul %0, %1, %cst {dimension_numbers = #tpu.dot_dimension_numbers<[1], [0], [0], [1], [0, 0, 1, 1], [], []>} : vector<8x768xbf16>, vector<768x128xbf16>, vector<8x128xf32> -> vector<8x128xf32>
    %c0_3 = arith.constant 0 : index
    %c0_4 = arith.constant 0 : index
    %3 = vector.load %arg3[%c0_3, %c0_4] : memref<8x128xf32, #tpu.memory_space<vmem>>, vector<8x128xf32>
    tpu.vector_store %arg3[%c0_3, %c0_4], %2 {strides = array<i32>} : memref<8x128xf32, #tpu.memory_space<vmem>>, vector<8x128xf32>,
    return
  }
  func.func @transform_0(%arg0: i32) -> (i32, i32) {
    %c0_i32 = arith.constant 0 : i32
    %c0_i32_0 = arith.constant 0 : i32
    return %arg0, %c0_i32 : i32, i32
  }
  func.func @transform_1(%arg0: i32) -> (i32, i32) {
    %c0_i32 = arith.constant 0 : i32
    %c0_i32_0 = arith.constant 0 : i32
    %c0_i32_1 = arith.constant 0 : i32
    return %c0_i32, %c0_i32_0 : i32, i32
  }
  func.func @transform_2(%arg0: i32) -> (i32, i32) {
    %c0_i32 = arith.constant 0 : i32
    %c0_i32_0 = arith.constant 0 : i32
    return %arg0, %c0_i32 : i32, i32
  }
}

</mosaic_0001>

<llo_original>
// kernel: istft_ri_pallas.1
$region0: #{istft_ri_pallas.1}
  #allocation0 [shape = 'u32[]', space=smem, size = 0x4, offset = 0x4, fixed_abs, tag = 'smem constant byte address 0x4 - core index']
  #allocation1 [shape = 'u32[72,128]{1,0:T(1,128)}', space=vmem, size = 0x9000, scoped, tag = 'internal scratch']
  %s0 = inlined_call_operand.vmem [shape: bf16[8,768], index: 0, kind: input, shape index: {}]
  %s1 = inlined_call_operand.vmem [shape: bf16[768,128], index: 1, kind: input, shape index: {}]
  %s2 = inlined_call_operand.vmem [shape: f32[8,128], index: 2, kind: output, shape index: {}]
  %s3 = sld [smem:[#allocation0]]
  $region18: #{istft_ri_pallas.1} parent=0
    _
  %s5 = ssub.s32 1, %s3
  %s6 = scalar_select 0, %s5, %s3
  // Predicated region
  $region2: #{istft_ri_pallas.1} parent=0 // pred_check
    _
  $region3: #{istft_ri_pallas.1} parent=0 // pred_check_branch
    %8 = sbr.rel (0) target = $region5
  $region4: #{istft_ri_pallas.1} parent=0 // pred_region
    _
  $region5: #{istft_ri_pallas.1} parent=0 // pred_fallthru
    _
  // Predicated region
  $region6: #{istft_ri_pallas.1} parent=0 // pred_check
    _
  $region7: #{istft_ri_pallas.1} parent=0 // pred_check_branch
    %10 = sbr.rel (0) target = $region9
  $region8: #{istft_ri_pallas.1} parent=0 // pred_region
    _
  $region9: #{istft_ri_pallas.1} parent=0 // pred_fallthru
    _
  %v11 = vld [vmem:[%s0] sm:$0xff]
  %v12 = vld [vmem:[%s0 + $0x8] sm:$0xff]
  %v13 = vld [vmem:[%s0 + $0x10] sm:$0xff]
  %v14 = vld [vmem:[%s1] sm:$0xf]
  %v15 = vld [vmem:[%s1 + $0x4] sm:$0xf]
  %v16 = vld [vmem:[%s1 + $0x8] sm:$0xf]
  %v17 = vld [vmem:[%s1 + $0xc] sm:$0xf]
  %v18 = vld [vmem:[%s1 + $0x10] sm:$0xf]
  %v19 = vld [vmem:[%s1 + $0x14] sm:$0xf]
  %v20 = vld [vmem:[%s1 + $0x18] sm:$0xf]
  %v21 = vld [vmem:[%s1 + $0x1c] sm:$0xf]
  %v22 = vld [vmem:[%s1 + $0x20] sm:$0xf]
  %v23 = vld [vmem:[%s1 + $0x24] sm:$0xf]
  %v24 = vld [vmem:[%s1 + $0x28] sm:$0xf]
  %v25 = vld [vmem:[%s1 + $0x2c] sm:$0xf]
  %v26 = vld [vmem:[%s1 + $0x30] sm:$0xf]
  %v27 = vld [vmem:[%s1 + $0x34] sm:$0xf]
  %v28 = vld [vmem:[%s1 + $0x38] sm:$0xf]
  %v29 = vld [vmem:[%s1 + $0x3c] sm:$0xf]
  %v30 = vld [vmem:[%s1 + $0x40] sm:$0xf]
  %v31 = vld [vmem:[%s1 + $0x44] sm:$0xf]
  %v32 = vld [vmem:[%s1 + $0x48] sm:$0xf]
  %v33 = vld [vmem:[%s1 + $0x4c] sm:$0xf]
  %v34 = vld [vmem:[%s1 + $0x50] sm:$0xf]
  %v35 = vld [vmem:[%s1 + $0x54] sm:$0xf]
  %v36 = vld [vmem:[%s1 + $0x58] sm:$0xf]
  %v37 = vld [vmem:[%s1 + $0x5c] sm:$0xf]
  %v38 = vld [vmem:[%s1 + $0x60] sm:$0xf]
  %v39 = vld [vmem:[%s1 + $0x64] sm:$0xf]
  %v40 = vld [vmem:[%s1 + $0x68] sm:$0xf]
  %v41 = vld [vmem:[%s1 + $0x6c] sm:$0xf]
  %v42 = vld [vmem:[%s1 + $0x70] sm:$0xf]
  %v43 = vld [vmem:[%s1 + $0x74] sm:$0xf]
  %v44 = vld [vmem:[%s1 + $0x78] sm:$0xf]
  %v45 = vld [vmem:[%s1 + $0x7c] sm:$0xf]
  %v46 = vld [vmem:[%s1 + $0x80] sm:$0xf]
  %v47 = vld [vmem:[%s1 + $0x84] sm:$0xf]
  %v48 = vld [vmem:[%s1 + $0x88] sm:$0xf]
  %v49 = vld [vmem:[%s1 + $0x8c] sm:$0xf]
  %v50 = vld [vmem:[%s1 + $0x90] sm:$0xf]
  %v51 = vld [vmem:[%s1 + $0x94] sm:$0xf]
  %v52 = vld [vmem:[%s1 + $0x98] sm:$0xf]
  %v53 = vld [vmem:[%s1 + $0x9c] sm:$0xf]
  %v54 = vld [vmem:[%s1 + $0xa0] sm:$0xf]
  %v55 = vld [vmem:[%s1 + $0xa4] sm:$0xf]
  %v56 = vld [vmem:[%s1 + $0xa8] sm:$0xf]
  %v57 = vld [vmem:[%s1 + $0xac] sm:$0xf]
  %v58 = vld [vmem:[%s1 + $0xb0] sm:$0xf]
  %v59 = vld [vmem:[%s1 + $0xb4] sm:$0xf]
  %v60 = vld [vmem:[%s1 + $0xb8] sm:$0xf]
  %v61 = vld [vmem:[%s1 + $0xbc] sm:$0xf]
  %v62 = vld [vmem:[%s1 + $0xc0] sm:$0xf]
  %v63 = vld [vmem:[%s1 + $0xc4] sm:$0xf]
  %v64 = vld [vmem:[%s1 + $0xc8] sm:$0xf]
  %v65 = vld [vmem:[%s1 + $0xcc] sm:$0xf]
  %v66 = vld [vmem:[%s1 + $0xd0] sm:$0xf]
  %v67 = vld [vmem:[%s1 + $0xd4] sm:$0xf]
  %v68 = vld [vmem:[%s1 + $0xd8] sm:$0xf]
  %v69 = vld [vmem:[%s1 + $0xdc] sm:$0xf]
  %v70 = vld [vmem:[%s1 + $0xe0] sm:$0xf]
  %v71 = vld [vmem:[%s1 + $0xe4] sm:$0xf]
  %v72 = vld [vmem:[%s1 + $0xe8] sm:$0xf]
  %v73 = vld [vmem:[%s1 + $0xec] sm:$0xf]
  %v74 = vld [vmem:[%s1 + $0xf0] sm:$0xf]
  %v75 = vld [vmem:[%s1 + $0xf4] sm:$0xf]
  %v76 = vld [vmem:[%s1 + $0xf8] sm:$0xf]
  %v77 = vld [vmem:[%s1 + $0xfc] sm:$0xf]
  %v78 = vld [vmem:[%s1 + $0x100] sm:$0xf]
  %v79 = vld [vmem:[%s1 + $0x104] sm:$0xf]
  %v80 = vld [vmem:[%s1 + $0x108] sm:$0xf]
  %v81 = vld [vmem:[%s1 + $0x10c] sm:$0xf]
  %v82 = vld [vmem:[%s1 + $0x110] sm:$0xf]
  %v83 = vld [vmem:[%s1 + $0x114] sm:$0xf]
  %v84 = vld [vmem:[%s1 + $0x118] sm:$0xf]
  %v85 = vld [vmem:[%s1 + $0x11c] sm:$0xf]
  %v86 = vld [vmem:[%s1 + $0x120] sm:$0xf]
  %v87 = vld [vmem:[%s1 + $0x124] sm:$0xf]
  %v88 = vld [vmem:[%s1 + $0x128] sm:$0xf]
  %v89 = vld [vmem:[%s1 + $0x12c] sm:$0xf]
  %v90 = vld [vmem:[%s1 + $0x130] sm:$0xf]
  %v91 = vld [vmem:[%s1 + $0x134] sm:$0xf]
  %v92 = vld [vmem:[%s1 + $0x138] sm:$0xf]
  %v93 = vld [vmem:[%s1 + $0x13c] sm:$0xf]
  %v94 = vld [vmem:[%s1 + $0x140] sm:$0xf]
  %v95 = vld [vmem:[%s1 + $0x144] sm:$0xf]
  %v96 = vld [vmem:[%s1 + $0x148] sm:$0xf]
  %v97 = vld [vmem:[%s1 + $0x14c] sm:$0xf]
  %v98 = vld [vmem:[%s1 + $0x150] sm:$0xf]
  %v99 = vld [vmem:[%s1 + $0x154] sm:$0xf]
  %v100 = vld [vmem:[%s1 + $0x158] sm:$0xf]
  %v101 = vld [vmem:[%s1 + $0x15c] sm:$0xf]
  %v102 = vld [vmem:[%s1 + $0x160] sm:$0xf]
  %v103 = vld [vmem:[%s1 + $0x164] sm:$0xf]
  %v104 = vld [vmem:[%s1 + $0x168] sm:$0xf]
  %v105 = vld [vmem:[%s1 + $0x16c] sm:$0xf]
  %v106 = vld [vmem:[%s1 + $0x170] sm:$0xf]
  %v107 = vld [vmem:[%s1 + $0x174] sm:$0xf]
  %v108 = vld [vmem:[%s1 + $0x178] sm:$0xf]
  %v109 = vld [vmem:[%s1 + $0x17c] sm:$0xf]
  %v113 = vunpack.c.l.b16 %v11
  %v114 = vunpack.c.h.b16 %v11
  %v115 = vunpack.c.l.b16 %v12
  %v116 = vunpack.c.h.b16 %v12
  %v117 = vunpack.c.l.b16 %v13
  %v118 = vunpack.c.h.b16 %v13
  %v119 = vpack.c.b16 %v113, %v113
  %v120 = vpack.c.b16 %v114, %v114
  %v121 = vpack.c.b16 %v115, %v115
  %v122 = vpack.c.b16 %v116, %v116
  %v123 = vpack.c.b16 %v117, %v117
  %v124 = vpack.c.b16 %v118, %v118
  %v227 = vunpack.c.l.b16 %v14
  %v228 = vunpack.c.l.b16 %v15
  %v229 = vunpack.c.l.b16 %v16
  %v230 = vunpack.c.l.b16 %v17
  %v231 = vunpack.c.l.b16 %v18
  %v232 = vunpack.c.l.b16 %v19
  %v233 = vunpack.c.l.b16 %v20
  %v234 = vunpack.c.l.b16 %v21
  %v235 = vunpack.c.l.b16 %v22
  %v236 = vunpack.c.l.b16 %v23
  %v237 = vunpack.c.l.b16 %v24
  %v238 = vunpack.c.l.b16 %v25
  %v239 = vunpack.c.l.b16 %v26
  %v240 = vunpack.c.l.b16 %v27
  %v241 = vunpack.c.l.b16 %v28
  %v242 = vunpack.c.l.b16 %v29
  %v243 = vunpack.c.l.b16 %v30
  %v244 = vunpack.c.l.b16 %v31
  %v245 = vunpack.c.l.b16 %v32
  %v246 = vunpack.c.l.b16 %v33
  %v247 = vunpack.c.l.b16 %v34
  %v248 = vunpack.c.l.b16 %v35
  %v249 = vunpack.c.l.b16 %v36
  %v250 = vunpack.c.l.b16 %v37
  %v251 = vunpack.c.l.b16 %v38
  %v252 = vunpack.c.l.b16 %v39
  %v253 = vunpack.c.l.b16 %v40
  %v254 = vunpack.c.l.b16 %v41
  %v255 = vunpack.c.l.b16 %v42
  %v256 = vunpack.c.l.b16 %v43
  %v257 = vunpack.c.l.b16 %v44
  %v258 = vunpack.c.l.b16 %v45
  %v259 = vunpack.c.l.b16 %v46
  %v260 = vunpack.c.l.b16 %v47
  %v261 = vunpack.c.l.b16 %v48
  %v262 = vunpack.c.l.b16 %v49
  %v263 = vunpack.c.l.b16 %v50
  %v264 = vunpack.c.l.b16 %v51
  %v265 = vunpack.c.l.b16 %v52
  %v266 = vunpack.c.l.b16 %v53
  %v267 = vunpack.c.l.b16 %v54
  %v268 = vunpack.c.l.b16 %v55
  %v269 = vunpack.c.l.b16 %v56
  %v270 = vunpack.c.l.b16 %v57
  %v271 = vunpack.c.l.b16 %v58
  %v272 = vunpack.c.l.b16 %v59
  %v273 = vunpack.c.l.b16 %v60
  %v274 = vunpack.c.l.b16 %v61
  %v275 = vunpack.c.l.b16 %v62
  %v276 = vunpack.c.l.b16 %v63
  %v277 = vunpack.c.l.b16 %v64
  %v278 = vunpack.c.l.b16 %v65
  %v279 = vunpack.c.l.b16 %v66
  %v280 = vunpack.c.l.b16 %v67
  %v281 = vunpack.c.l.b16 %v68
  %v282 = vunpack.c.l.b16 %v69
  %v283 = vunpack.c.l.b16 %v70
  %v284 = vunpack.c.l.b16 %v71
  %v285 = vunpack.c.l.b16 %v72
  %v286 = vunpack.c.l.b16 %v73
  %v287 = vunpack.c.l.b16 %v74
  %v288 = vunpack.c.l.b16 %v75
  %v289 = vunpack.c.l.b16 %v76
  %v290 = vunpack.c.l.b16 %v77
  %v291 = vunpack.c.l.b16 %v78
  %v292 = vunpack.c.l.b16 %v79
  %v293 = vunpack.c.l.b16 %v80
  %v294 = vunpack.c.l.b16 %v81
  %v295 = vunpack.c.l.b16 %v82
  %v296 = vunpack.c.l.b16 %v83
  %v297 = vunpack.c.l.b16 %v84
  %v298 = vunpack.c.l.b16 %v85
  %v299 = vunpack.c.l.b16 %v86
  %v300 = vunpack.c.l.b16 %v87
  %v301 = vunpack.c.l.b16 %v88
  %v302 = vunpack.c.l.b16 %v89
  %v303 = vunpack.c.l.b16 %v90
  %v304 = vunpack.c.l.b16 %v91
  %v305 = vunpack.c.l.b16 %v92
  %v306 = vunpack.c.l.b16 %v93
  %v307 = vunpack.c.l.b16 %v94
  %v308 = vunpack.c.l.b16 %v95
  %v309 = vunpack.c.l.b16 %v96
  %v310 = vunpack.c.l.b16 %v97
  %v311 = vunpack.c.l.b16 %v98
  %v312 = vunpack.c.l.b16 %v99
  %v313 = vunpack.c.l.b16 %v100
  %v314 = vunpack.c.l.b16 %v101
  %v315 = vunpack.c.l.b16 %v102
  %v316 = vunpack.c.l.b16 %v103
  %v317 = vunpack.c.l.b16 %v104
  %v318 = vunpack.c.l.b16 %v105
  %v319 = vunpack.c.l.b16 %v106
  %v320 = vunpack.c.l.b16 %v107
  %v321 = vunpack.c.l.b16 %v108
  %v322 = vunpack.c.l.b16 %v109
  %v323 = vpack.c.b16 %v228, %v227
  %v324 = vpack.c.b16 %v230, %v229
  %v325 = vpack.c.b16 %v232, %v231
  %v326 = vpack.c.b16 %v234, %v233
  %v327 = vpack.c.b16 %v236, %v235
  %v328 = vpack.c.b16 %v238, %v237
  %v329 = vpack.c.b16 %v240, %v239
  %v330 = vpack.c.b16 %v242, %v241
  %v331 = vpack.c.b16 %v244, %v243
  %v332 = vpack.c.b16 %v246, %v245
  %v333 = vpack.c.b16 %v248, %v247
  %v334 = vpack.c.b16 %v250, %v249
  %v335 = vpack.c.b16 %v252, %v251
  %v336 = vpack.c.b16 %v254, %v253
  %v337 = vpack.c.b16 %v256, %v255
  %v338 = vpack.c.b16 %v258, %v257
  %v339 = vpack.c.b16 %v260, %v259
  %v340 = vpack.c.b16 %v262, %v261
  %v341 = vpack.c.b16 %v264, %v263
  %v342 = vpack.c.b16 %v266, %v265
  %v343 = vpack.c.b16 %v268, %v267
  %v344 = vpack.c.b16 %v270, %v269
  %v345 = vpack.c.b16 %v272, %v271
  %v346 = vpack.c.b16 %v274, %v273
  %v347 = vpack.c.b16 %v276, %v275
  %v348 = vpack.c.b16 %v278, %v277
  %v349 = vpack.c.b16 %v280, %v279
  %v350 = vpack.c.b16 %v282, %v281
  %v351 = vpack.c.b16 %v284, %v283
  %v352 = vpack.c.b16 %v286, %v285
  %v353 = vpack.c.b16 %v288, %v287
  %v354 = vpack.c.b16 %v290, %v289
  %v355 = vpack.c.b16 %v292, %v291
  %v356 = vpack.c.b16 %v294, %v293
  %v357 = vpack.c.b16 %v296, %v295
  %v358 = vpack.c.b16 %v298, %v297
  %v359 = vpack.c.b16 %v300, %v299
  %v360 = vpack.c.b16 %v302, %v301
  %v361 = vpack.c.b16 %v304, %v303
  %v362 = vpack.c.b16 %v306, %v305
  %v363 = vpack.c.b16 %v308, %v307
  %v364 = vpack.c.b16 %v310, %v309
  %v365 = vpack.c.b16 %v312, %v311
  %v366 = vpack.c.b16 %v314, %v313
  %v367 = vpack.c.b16 %v316, %v315
  %v368 = vpack.c.b16 %v318, %v317
  %v369 = vpack.c.b16 %v320, %v319
  %v370 = vpack.c.b16 %v322, %v321
  %419 = vmatpush.bf16.msra.mxu0 %v330
  %420 = vmatpush.bf16.msra.mxu0 %v329
  %421 = vmatpush.bf16.msra.mxu0 %v328
  %422 = vmatpush.bf16.msra.mxu0 %v327
  %423 = vmatpush.bf16.msra.mxu0 %v326
  %424 = vmatpush.bf16.msra.mxu0 %v325
  %425 = vmatpush.bf16.msra.mxu0 %v324
  %426 = vmatpush.bf16.msra.mxu0 %v323
  %427 = vmatmul.bf16.gmra.mxu0 %v119
  %v428 = vpop.f32.mrf.mxu0
  %v429 = vadd.f32 0.0, %v428
  %v430 = vpop.f32.mrf.mxu0
  %431 = vdwg.mxu0
  %432 = vmatpush.bf16.msra.mxu0 %v338
  %433 = vmatpush.bf16.msra.mxu0 %v337
  %434 = vmatpush.bf16.msra.mxu0 %v336
  %435 = vmatpush.bf16.msra.mxu0 %v335
  %436 = vmatpush.bf16.msra.mxu0 %v334
  %437 = vmatpush.bf16.msra.mxu0 %v333
  %438 = vmatpush.bf16.msra.mxu0 %v332
  %439 = vmatpush.bf16.msra.mxu0 %v331
  %440 = vmatmul.bf16.gmra.mxu0 %v120
  %v441 = vpop.f32.mrf.mxu0
  %v442 = vadd.f32 %v429, %v441
  %v443 = vpop.f32.mrf.mxu0
  %444 = vdwg.mxu0
  %445 = vmatpush.bf16.msra.mxu0 %v346
  %446 = vmatpush.bf16.msra.mxu0 %v345
  %447 = vmatpush.bf16.msra.mxu0 %v344
  %448 = vmatpush.bf16.msra.mxu0 %v343
  %449 = vmatpush.bf16.msra.mxu0 %v342
  %450 = vmatpush.bf16.msra.mxu0 %v341
  %451 = vmatpush.bf16.msra.mxu0 %v340
  %452 = vmatpush.bf16.msra.mxu0 %v339
  %453 = vmatmul.bf16.gmra.mxu0 %v121
  %v454 = vpop.f32.mrf.mxu0
  %v455 = vadd.f32 %v442, %v454
  %v456 = vpop.f32.mrf.mxu0
  %457 = vdwg.mxu0
  %458 = vmatpush.bf16.msra.mxu0 %v354
  %459 = vmatpush.bf16.msra.mxu0 %v353
  %460 = vmatpush.bf16.msra.mxu0 %v352
  %461 = vmatpush.bf16.msra.mxu0 %v351
  %462 = vmatpush.bf16.msra.mxu0 %v350
  %463 = vmatpush.bf16.msra.mxu0 %v349
  %464 = vmatpush.bf16.msra.mxu0 %v348
  %465 = vmatpush.bf16.msra.mxu0 %v347
  %466 = vmatmul.bf16.gmra.mxu0 %v122
  %v467 = vpop.f32.mrf.mxu0
  %v468 = vadd.f32 %v455, %v467
  %v469 = vpop.f32.mrf.mxu0
  %470 = vdwg.mxu0
  %471 = vmatpush.bf16.msra.mxu0 %v362
  %472 = vmatpush.bf16.msra.mxu0 %v361
  %473 = vmatpush.bf16.msra.mxu0 %v360
  %474 = vmatpush.bf16.msra.mxu0 %v359
  %475 = vmatpush.bf16.msra.mxu0 %v358
  %476 = vmatpush.bf16.msra.mxu0 %v357
  %477 = vmatpush.bf16.msra.mxu0 %v356
  %478 = vmatpush.bf16.msra.mxu0 %v355
  %479 = vmatmul.bf16.gmra.mxu0 %v123
  %v480 = vpop.f32.mrf.mxu0
  %v481 = vadd.f32 %v468, %v480
  %v482 = vpop.f32.mrf.mxu0
  %483 = vdwg.mxu0
  %484 = vmatpush.bf16.msra.mxu0 %v370
  %485 = vmatpush.bf16.msra.mxu0 %v369
  %486 = vmatpush.bf16.msra.mxu0 %v368
  %487 = vmatpush.bf16.msra.mxu0 %v367
  %488 = vmatpush.bf16.msra.mxu0 %v366
  %489 = vmatpush.bf16.msra.mxu0 %v365
  %490 = vmatpush.bf16.msra.mxu0 %v364
  %491 = vmatpush.bf16.msra.mxu0 %v363
  %492 = vmatmul.bf16.gmra.mxu0 %v124
  %v493 = vpop.f32.mrf.mxu0
  %v494 = vadd.f32 %v481, %v493
  %v495 = vpop.f32.mrf.mxu0
  %496 = vdwg.mxu0
  %497 = vst [vmem:[%s2] sm:$0xff] %v494
  // Predicated region
  $region10: #{istft_ri_pallas.1} parent=0 // pred_check
    _
  $region11: #{istft_ri_pallas.1} parent=0 // pred_check_branch
    %499 = sbr.rel (0) target = $region13
  $region12: #{istft_ri_pallas.1} parent=0 // pred_region
    _
  $region13: #{istft_ri_pallas.1} parent=0 // pred_fallthru
    _
  // Predicated region
  $region14: #{istft_ri_pallas.1} parent=0 // pred_check
    _
  $region15: #{istft_ri_pallas.1} parent=0 // pred_check_branch
    %501 = sbr.rel (0) target = $region17
  $region16: #{istft_ri_pallas.1} parent=0 // pred_region
    _
  $region17: #{istft_ri_pallas.1} parent=0 // pred_fallthru
    _

</llo_original>
